<compile_context>
chip_gen: v6e
topology: v6e:2x2x1
jax: 0.10.0
libtpu: 0.0.40
codegen_flags: <defaults>
</compile_context>

<pallas_src>
import functools

import jax
import jax.numpy as jnp
from jax.experimental import pallas as pl
from jax.experimental.pallas import tpu as pltpu


def _round_up(x, m):
    return (x + m - 1) // m * m


def _fused_split_kernel(x0_ref, x1_ref, t0_ref, b0_ref, t1_ref, b1_ref,
                        *, split0, split1):
    """Per grid step: load one (blk, W) row-major tile of each input, transpose
    it in-register (XLU, hidden under the DMA) and store lane-dense
    (W_slice, blk) slabs with full-width vector stores."""
    x0t = jnp.transpose(x0_ref[...], (1, 0))          # (W0, blk0)
    t0_ref[...] = x0t[0:split0, :]
    b0_ref[...] = x0t[split0:, :]

    x1t = jnp.transpose(x1_ref[...], (1, 0))          # (W1, blk1)
    t1_ref[...] = x1t[0:split1, :]
    b1_ref[...] = x1t[split1:, :]


def _vmem_bytes_estimate(blk0, w0, split0, blk1, w1, split1, itemsize):
    """Double-buffered working set, including Mosaic's (8,128) tile padding
    (the narrow-W input tiles are lane-padded to 128)."""
    lane, sub = 128, 8
    in0 = _round_up(blk0, sub) * _round_up(w0, lane)
    in1 = _round_up(blk1, sub) * _round_up(w1, lane)
    out0 = (_round_up(split0, sub) + _round_up(w0 - split0, sub)) * _round_up(blk0, lane)
    out1 = (_round_up(split1, sub) + _round_up(w1 - split1, sub)) * _round_up(blk1, lane)
    return 2 * (in0 + in1 + out0 + out1) * itemsize


def _encoder_slice_lane_dense(inputs_0, inputs_1, *, lane_block=8192):
    """Fused lane-dense split of both encoder inputs.

    Returns four slabs (documented layout):
      s0_top: (9,     N0*C0*H0)  == inputs_0[..., :9]  with W on sublanes
      s0_bot: (W0-9,  N0*C0*H0)  == inputs_0[..., 9:]
      s1_top: (6,     N1*C1*H1)  == inputs_1[..., :6]
      s1_bot: (W1-6,  N1*C1*H1)  == inputs_1[..., 6:]
    """
    n0, c0, h0, w0 = inputs_0.shape
    n1, c1, h1, w1 = inputs_1.shape
    split0, split1 = 9, 6
    assert w0 > split0 and c0 > 1 and w1 > split1, "shapes inconsistent with Encoder.forward"
    assert inputs_0.dtype == inputs_1.dtype
    m0, m1 = n0 * c0 * h0, n1 * c1 * h1
    dtype = inputs_0.dtype

    # Free row-major views -- no HBM relayout pass on the input side.
    x0 = inputs_0.reshape(m0, w0)
    x1 = inputs_1.reshape(m1, w1)

    # Grid over the row (-> output lane) axis.  Force >=2 steps when there is
    # enough work so both v7x TensorCores drive their own DMA traffic.
    n_tiles = max(pl.cdiv(m0, lane_block), pl.cdiv(m1, lane_block))
    if n_tiles == 1 and max(m0, m1) >= 256:
        n_tiles = 2

    if n_tiles == 1:
        blk0, blk1 = m0, m1          # full-array blocks (exempt from (8,128) rule)
    else:
        blk0 = _round_up(pl.cdiv(m0, n_tiles), 128)
        blk1 = _round_up(pl.cdiv(m1, n_tiles), 128)

    # Clamp block indices: if one input has fewer (rounded) tiles than the
    # grid, trailing steps just rewrite its last tile (idempotent copy).
    last0 = pl.cdiv(m0, blk0) - 1
    last1 = pl.cdiv(m1, blk1) - 1

    vmem_limit = max(
        int(1.5 * _vmem_bytes_estimate(blk0, w0, split0, blk1, w1, split1,
                                       jnp.dtype(dtype).itemsize)),
        16 << 20,
    )

    return pl.pallas_call(
        functools.partial(_fused_split_kernel, split0=split0, split1=split1),
        out_shape=(
            jax.ShapeDtypeStruct((split0, m0), dtype),
            jax.ShapeDtypeStruct((w0 - split0, m0), dtype),
            jax.ShapeDtypeStruct((split1, m1), dtype),
            jax.ShapeDtypeStruct((w1 - split1, m1), dtype),
        ),
        grid=(n_tiles,),
        in_specs=[
            pl.BlockSpec((blk0, w0), lambda i: (jnp.minimum(i, last0), 0)),
            pl.BlockSpec((blk1, w1), lambda i: (jnp.minimum(i, last1), 0)),
        ],
        out_specs=(
            pl.BlockSpec((split0, blk0), lambda i: (0, jnp.minimum(i, last0))),
            pl.BlockSpec((w0 - split0, blk0), lambda i: (0, jnp.minimum(i, last0))),
            pl.BlockSpec((split1, blk1), lambda i: (0, jnp.minimum(i, last1))),
            pl.BlockSpec((w1 - split1, blk1), lambda i: (0, jnp.minimum(i, last1))),
        ),
        compiler_params=pltpu.CompilerParams(
            dimension_semantics=("parallel",),   # shards lane tiles over TCs (v7x)
            vmem_limit_bytes=vmem_limit,
        ),
    )(x0, x1)


@functools.partial(jax.jit, static_argnames=("lane_dense_outputs",))
def encoder_forward(inputs_0, inputs_1, sparse_feature=None, dense_feature=None,
                    *, lane_dense_outputs=False):
    """JAX/Pallas equivalent of Encoder.forward.

    Default returns the NCHW-sliced tensors `_forward` would receive (module
    semantics).  With lane_dense_outputs=True the kernel's native lane-dense
    (W_slice, N*C*H) slabs are returned unchanged so a concrete `_forward` can
    fold the relayout into its first compute kernel instead of paying an extra
    HBM pass here.
    """
    n0, c0, h0, w0 = inputs_0.shape
    n1, c1, h1, w1 = inputs_1.shape

    s0_top, s0_bot, s1_top, s1_bot = _encoder_slice_lane_dense(inputs_0, inputs_1)

    # TODO(synk): `Encoder._forward` is abstract in the reference module; there
    # is no concrete computation to fuse, so we return the encoder-inputs
    # dictionary that `_forward` would receive.
    if lane_dense_outputs:
        return {
            "target_agent_lane_dense": s0_top,   # (9,    N0*C0*H0); target = channel 0
            "agent_mask_lane_dense":   s0_bot,   # (W0-9, N0*C0*H0)
            "lane_lane_dense":         s1_top,   # (6,    N1*C1*H1)
            "lane_mask_lane_dense":    s1_bot,   # (W1-6, N1*C1*H1)
            "sparse_feature": sparse_feature,
            "dense_feature": dense_feature,
            "target_pos_in_ego": None,
            "img": None,
        }

    # Lazy relayout to NCHW, only because the consumer layout must match the
    # PyTorch module exactly here.
    slab0 = s0_top.reshape(9, n0, c0, h0).transpose(1, 2, 3, 0)
    agent_mask = s0_bot.reshape(w0 - 9, n0, c0, h0).transpose(1, 2, 3, 0)
    lane = s1_top.reshape(6, n1, c1, h1).transpose(1, 2, 3, 0)
    lane_mask = s1_bot.reshape(w1 - 6, n1, c1, h1).transpose(1, 2, 3, 0)

    return {
        "target": slab0[:, 0:1],
        "agent": slab0[:, 1:],
        "agent_mask": agent_mask,
        "lane": lane,
        "lane_mask": lane_mask,
        "sparse_feature": sparse_feature,
        "dense_feature": dense_feature,
        "target_pos_in_ego": None,
        "img": None,
    }


if __name__ == "__main__":
    key = jax.random.PRNGKey(0)
    k0, k1, k2, k3 = jax.random.split(key, 4)

    # Small shapes consistent with the forward pass (NCHW; W0 > 9, W1 > 6).
    inputs_0 = jax.random.normal(k0, (2, 4, 16, 12), dtype=jnp.float32)  # N0,C0,H0,W0
    inputs_1 = jax.random.normal(k1, (2, 5, 16, 8), dtype=jnp.float32)   # N1,C1,H1,W1
    sparse_feature = jax.random.normal(k2, (2, 8), dtype=jnp.float32)
    dense_feature = jax.random.normal(k3, (2, 8), dtype=jnp.float32)

    out = encoder_forward(inputs_0, inputs_1, sparse_feature, dense_feature)
    jax.block_until_ready(out["target"])
    jax.block_until_ready(out["lane_mask"])

    # Verify against plain-JAX reference of the PyTorch slicing semantics.
    ref = {
        "target":     inputs_0[:, 0:1, :, 0:9],
        "agent":      inputs_0[:, 1:,  :, 0:9],
        "agent_mask": inputs_0[:, :,   :, 9:],
        "lane":       inputs_1[:, :,   :, 0:6],
        "lane_mask":  inputs_1[:, :,   :, 6:],
    }
    for name, r in ref.items():
        assert out[name].shape == r.shape, (name, out[name].shape, r.shape)
        assert jnp.array_equal(out[name], r), name

    # Also sanity-check the lane-dense fast path (layout a concrete `_forward`
    # should consume directly).
    ld = encoder_forward(inputs_0, inputs_1, sparse_feature, dense_feature,
                         lane_dense_outputs=True)
    jax.block_until_ready(ld["target_agent_lane_dense"])
    ref_ld = jnp.transpose(inputs_0[..., :9], (3, 0, 1, 2)).reshape(9, -1)
    assert jnp.array_equal(ld["target_agent_lane_dense"], ref_ld)
    ref_ld_mask = jnp.transpose(inputs_1[..., 6:], (3, 0, 1, 2)).reshape(2, -1)
    assert jnp.array_equal(ld["lane_mask_lane_dense"], ref_ld_mask)

    print("KERNEL_OK")
</pallas_src>

<mosaic_0001>
module attributes {stable_mosaic.version = 11 : i64} {
  func.func @_fused_split_kernel(%arg0: i32, %arg1: memref<128x12xf32, #tpu.memory_space<vmem>>, %arg2: memref<160x8xf32, #tpu.memory_space<vmem>>, %arg3: memref<9x128xf32, #tpu.memory_space<vmem>>, %arg4: memref<3x128xf32, #tpu.memory_space<vmem>>, %arg5: memref<6x160xf32, #tpu.memory_space<vmem>>, %arg6: memref<2x160xf32, #tpu.memory_space<vmem>>) attributes {dimension_semantics = [#tpu.dimension_semantics<parallel>], iteration_bounds = array<i64: 1>, scalar_prefetch = 0 : i64, scratch_operands = 0 : i64, tpu.core_type = #tpu.core_type<tc>, window_params = [{transform_indices = @transform_0, window_bounds = array<i64: 128, 12>}, {transform_indices = @transform_1, window_bounds = array<i64: 160, 8>}, {transform_indices = @transform_2, window_bounds = array<i64: 9, 128>}, {transform_indices = @transform_3, window_bounds = array<i64: 3, 128>}, {transform_indices = @transform_4, window_bounds = array<i64: 6, 160>}, {transform_indices = @transform_5, window_bounds = array<i64: 2, 160>}]} {
    %c0 = arith.constant 0 : index
    %c0_0 = arith.constant 0 : index
    %0 = vector.load %arg1[%c0, %c0_0] : memref<128x12xf32, #tpu.memory_space<vmem>>, vector<128x12xf32>
    %1 = tpu.transpose %0, [1, 0] : vector<128x12xf32> -> vector<12x128xf32>
    %2 = vector.extract_strided_slice %1 {offsets = [0, 0], sizes = [9, 128], strides = [1, 1]} : vector<12x128xf32> to vector<9x128xf32>
    %c0_1 = arith.constant 0 : index
    %c0_2 = arith.constant 0 : index
    %3 = vector.load %arg3[%c0_1, %c0_2] : memref<9x128xf32, #tpu.memory_space<vmem>>, vector<9x128xf32>
    tpu.vector_store %arg3[%c0_1, %c0_2], %2 {strides = array<i32>} : memref<9x128xf32, #tpu.memory_space<vmem>>, vector<9x128xf32>,
    %4 = vector.extract_strided_slice %1 {offsets = [9, 0], sizes = [3, 128], strides = [1, 1]} : vector<12x128xf32> to vector<3x128xf32>
    %c0_3 = arith.constant 0 : index
    %c0_4 = arith.constant 0 : index
    %5 = vector.load %arg4[%c0_3, %c0_4] : memref<3x128xf32, #tpu.memory_space<vmem>>, vector<3x128xf32>
    tpu.vector_store %arg4[%c0_3, %c0_4], %4 {strides = array<i32>} : memref<3x128xf32, #tpu.memory_space<vmem>>, vector<3x128xf32>,
    %c0_5 = arith.constant 0 : index
    %c0_6 = arith.constant 0 : index
    %6 = vector.load %arg2[%c0_5, %c0_6] : memref<160x8xf32, #tpu.memory_space<vmem>>, vector<160x8xf32>
    %7 = tpu.transpose %6, [1, 0] : vector<160x8xf32> -> vector<8x160xf32>
    %8 = vector.extract_strided_slice %7 {offsets = [0, 0], sizes = [6, 160], strides = [1, 1]} : vector<8x160xf32> to vector<6x160xf32>
    %c0_7 = arith.constant 0 : index
    %c0_8 = arith.constant 0 : index
    %9 = vector.load %arg5[%c0_7, %c0_8] : memref<6x160xf32, #tpu.memory_space<vmem>>, vector<6x160xf32>
    tpu.vector_store %arg5[%c0_7, %c0_8], %8 {strides = array<i32>} : memref<6x160xf32, #tpu.memory_space<vmem>>, vector<6x160xf32>,
    %10 = vector.extract_strided_slice %7 {offsets = [6, 0], sizes = [2, 160], strides = [1, 1]} : vector<8x160xf32> to vector<2x160xf32>
    %c0_9 = arith.constant 0 : index
    %c0_10 = arith.constant 0 : index
    %11 = vector.load %arg6[%c0_9, %c0_10] : memref<2x160xf32, #tpu.memory_space<vmem>>, vector<2x160xf32>
    tpu.vector_store %arg6[%c0_9, %c0_10], %10 {strides = array<i32>} : memref<2x160xf32, #tpu.memory_space<vmem>>, vector<2x160xf32>,
    return
  }
  func.func @transform_0(%arg0: i32) -> (i32, i32) {
    %c0_i32 = arith.constant 0 : i32
    %0 = arith.minsi %arg0, %c0_i32 : i32
    %c0_i32_0 = arith.constant 0 : i32
    %c0_i32_1 = arith.constant 0 : i32
    return %0, %c0_i32_0 : i32, i32
  }
  func.func @transform_1(%arg0: i32) -> (i32, i32) {
    %c0_i32 = arith.constant 0 : i32
    %0 = arith.minsi %arg0, %c0_i32 : i32
    %c0_i32_0 = arith.constant 0 : i32
    %c0_i32_1 = arith.constant 0 : i32
    return %0, %c0_i32_0 : i32, i32
  }
  func.func @transform_2(%arg0: i32) -> (i32, i32) {
    %c0_i32 = arith.constant 0 : i32
    %0 = arith.minsi %arg0, %c0_i32 : i32
    %c0_i32_0 = arith.constant 0 : i32
    %c0_i32_1 = arith.constant 0 : i32
    return %c0_i32_0, %0 : i32, i32
  }
  func.func @transform_3(%arg0: i32) -> (i32, i32) {
    %c0_i32 = arith.constant 0 : i32
    %0 = arith.minsi %arg0, %c0_i32 : i32
    %c0_i32_0 = arith.constant 0 : i32
    %c0_i32_1 = arith.constant 0 : i32
    return %c0_i32_0, %0 : i32, i32
  }
  func.func @transform_4(%arg0: i32) -> (i32, i32) {
    %c0_i32 = arith.constant 0 : i32
    %0 = arith.minsi %arg0, %c0_i32 : i32
    %c0_i32_0 = arith.constant 0 : i32
    %c0_i32_1 = arith.constant 0 : i32
    return %c0_i32_0, %0 : i32, i32
  }
  func.func @transform_5(%arg0: i32) -> (i32, i32) {
    %c0_i32 = arith.constant 0 : i32
    %0 = arith.minsi %arg0, %c0_i32 : i32
    %c0_i32_0 = arith.constant 0 : i32
    %c0_i32_1 = arith.constant 0 : i32
    return %c0_i32_0, %0 : i32, i32
  }
}

</mosaic_0001>

<llo_original>
// kernel: encoder_forward.1
$region0: #{encoder_forward.1}
  #allocation0 [shape = 'u32[]', space=smem, size = 0x4, offset = 0x4, fixed_abs, tag = 'smem constant byte address 0x4 - core index']
  #allocation1 [shape = 'u32[144,128]{1,0:T(1,128)}', space=vmem, size = 0x12000, scoped, tag = 'internal scratch']
  %s0 = inlined_call_operand.vmem [shape: f32[128,12], index: 0, kind: input, shape index: {}]
  %s1 = inlined_call_operand.vmem [shape: f32[160,8], index: 1, kind: input, shape index: {}]
  %s2 = inlined_call_operand.vmem [shape: f32[9,128], index: 2, kind: output, shape index: {0}]
  %s3 = inlined_call_operand.vmem [shape: f32[3,128], index: 3, kind: output, shape index: {1}]
  %s4 = inlined_call_operand.vmem [shape: f32[6,160], index: 4, kind: output, shape index: {2}]
  %s5 = inlined_call_operand.vmem [shape: f32[2,160], index: 5, kind: output, shape index: {3}]
  %6 = xla_tuple %s2, %s3, %s4, %s5
  %s7 = sld [smem:[#allocation0]]
  $region42: #{encoder_forward.1} parent=0
    _
  %s9 = ssub.s32 1, %s7
  %s10 = scalar_select 0, %s9, %s7
  // Predicated region
  $region2: #{encoder_forward.1} parent=0 // pred_check
    _
  $region3: #{encoder_forward.1} parent=0 // pred_check_branch
    %12 = sbr.rel (0) target = $region5
  $region4: #{encoder_forward.1} parent=0 // pred_region
    _
  $region5: #{encoder_forward.1} parent=0 // pred_fallthru
    _
  // Predicated region
  $region6: #{encoder_forward.1} parent=0 // pred_check
    _
  $region7: #{encoder_forward.1} parent=0 // pred_check_branch
    %14 = sbr.rel (0) target = $region9
  $region8: #{encoder_forward.1} parent=0 // pred_region
    _
  $region9: #{encoder_forward.1} parent=0 // pred_fallthru
    _
  %v15 = vld [vmem:[%s0] sm:$0xff]
  %v16 = vld [vmem:[%s0 + $0x8] sm:$0xff]
  %v17 = vld [vmem:[%s0 + $0x10] sm:$0xff]
  %v18 = vld [vmem:[%s0 + $0x18] sm:$0xff]
  %v19 = vld [vmem:[%s0 + $0x20] sm:$0xff]
  %v20 = vld [vmem:[%s0 + $0x28] sm:$0xff]
  %v21 = vld [vmem:[%s0 + $0x30] sm:$0xff]
  %v22 = vld [vmem:[%s0 + $0x38] sm:$0xff]
  %v23 = vld [vmem:[%s0 + $0x40] sm:$0xff]
  %v24 = vld [vmem:[%s0 + $0x48] sm:$0xff]
  %v25 = vld [vmem:[%s0 + $0x50] sm:$0xff]
  %v26 = vld [vmem:[%s0 + $0x58] sm:$0xff]
  %v27 = vld [vmem:[%s0 + $0x60] sm:$0xff]
  %v28 = vld [vmem:[%s0 + $0x68] sm:$0xff]
  %v29 = vld [vmem:[%s0 + $0x70] sm:$0xff]
  %v30 = vld [vmem:[%s0 + $0x78] sm:$0xff]
  %31 = vxpose.xlu0.b32.start [1/16] %v15, 128
  %32 = vxpose.xlu0.b32.cont [2/16] %v16, 128
  %33 = vxpose.xlu0.b32.cont [3/16] %v17, 128
  %34 = vxpose.xlu0.b32.cont [4/16] %v18, 128
  %35 = vxpose.xlu0.b32.cont [5/16] %v19, 128
  %36 = vxpose.xlu0.b32.cont [6/16] %v20, 128
  %37 = vxpose.xlu0.b32.cont [7/16] %v21, 128
  %38 = vxpose.xlu0.b32.cont [8/16] %v22, 128
  %39 = vxpose.xlu0.b32.cont [9/16] %v23, 128
  %40 = vxpose.xlu0.b32.cont [10/16] %v24, 128
  %41 = vxpose.xlu0.b32.cont [11/16] %v25, 128
  %42 = vxpose.xlu0.b32.cont [12/16] %v26, 128
  %43 = vxpose.xlu0.b32.cont [13/16] %v27, 128
  %44 = vxpose.xlu0.b32.cont [14/16] %v28, 128
  %45 = vxpose.xlu0.b32.cont [15/16] %v29, 128
  %46 = vxpose.xlu0.b32.end [16/16] %v30, 128
  %v47 = vpop.trf.xlu0
  %v48 = vpop.trf.xlu0
  %v49 = vpop.trf.xlu0
  %v50 = vpop.trf.xlu0
  %v51 = vpop.trf.xlu0
  %v52 = vpop.trf.xlu0
  %v53 = vpop.trf.xlu0
  %v54 = vpop.trf.xlu0
  %v55 = vpop.trf.xlu0
  %v56 = vpop.trf.xlu0
  %v57 = vpop.trf.xlu0
  %v58 = vpop.trf.xlu0
  %v59 = vpop.trf.xlu0
  %v60 = vpop.trf.xlu0
  %v61 = vpop.trf.xlu0
  %v62 = vpop.trf.xlu0
  %63 = vst [vmem:[%s2] sm:$0xff] %v47
  %64 = vst [vmem:[%s2 + $0x8] sm:$0x1] %v48
  %65 = vst [vmem:[%s3 - $0x1] sm:$0xe] %v48
  %v66 = vld [vmem:[%s1] sm:$0xff]
  %v67 = vld [vmem:[%s1 + $0x8] sm:$0xff]
  %v68 = vld [vmem:[%s1 + $0x10] sm:$0xff]
  %v69 = vld [vmem:[%s1 + $0x18] sm:$0xff]
  %v70 = vld [vmem:[%s1 + $0x20] sm:$0xff]
  %v71 = vld [vmem:[%s1 + $0x28] sm:$0xff]
  %v72 = vld [vmem:[%s1 + $0x30] sm:$0xff]
  %v73 = vld [vmem:[%s1 + $0x38] sm:$0xff]
  %v74 = vld [vmem:[%s1 + $0x40] sm:$0xff]
  %v75 = vld [vmem:[%s1 + $0x48] sm:$0xff]
  %v76 = vld [vmem:[%s1 + $0x50] sm:$0xff]
  %v77 = vld [vmem:[%s1 + $0x58] sm:$0xff]
  %v78 = vld [vmem:[%s1 + $0x60] sm:$0xff]
  %v79 = vld [vmem:[%s1 + $0x68] sm:$0xff]
  %v80 = vld [vmem:[%s1 + $0x70] sm:$0xff]
  %v81 = vld [vmem:[%s1 + $0x78] sm:$0xff]
  %v82 = vld [vmem:[%s1 + $0x80] sm:$0xff]
  %v83 = vld [vmem:[%s1 + $0x88] sm:$0xff]
  %v84 = vld [vmem:[%s1 + $0x90] sm:$0xff]
  %v85 = vld [vmem:[%s1 + $0x98] sm:$0xff]
  %86 = vxpose.xlu0.b32.start [1/16] %v66, 128
  %87 = vxpose.xlu0.b32.cont [2/16] %v67, 128
  %88 = vxpose.xlu0.b32.cont [3/16] %v68, 128
  %89 = vxpose.xlu0.b32.cont [4/16] %v69, 128
  %90 = vxpose.xlu0.b32.cont [5/16] %v70, 128
  %91 = vxpose.xlu0.b32.cont [6/16] %v71, 128
  %92 = vxpose.xlu0.b32.cont [7/16] %v72, 128
  %93 = vxpose.xlu0.b32.cont [8/16] %v73, 128
  %94 = vxpose.xlu0.b32.cont [9/16] %v74, 128
  %95 = vxpose.xlu0.b32.cont [10/16] %v75, 128
  %96 = vxpose.xlu0.b32.cont [11/16] %v76, 128
  %97 = vxpose.xlu0.b32.cont [12/16] %v77, 128
  %98 = vxpose.xlu0.b32.cont [13/16] %v78, 128
  %99 = vxpose.xlu0.b32.cont [14/16] %v79, 128
  %100 = vxpose.xlu0.b32.cont [15/16] %v80, 128
  %101 = vxpose.xlu0.b32.end [16/16] %v81, 128
  %v102 = vpop.trf.xlu0
  %v103 = vpop.trf.xlu0
  %v104 = vpop.trf.xlu0
  %v105 = vpop.trf.xlu0
  %v106 = vpop.trf.xlu0
  %v107 = vpop.trf.xlu0
  %v108 = vpop.trf.xlu0
  %v109 = vpop.trf.xlu0
  %v110 = vpop.trf.xlu0
  %v111 = vpop.trf.xlu0
  %v112 = vpop.trf.xlu0
  %v113 = vpop.trf.xlu0
  %v114 = vpop.trf.xlu0
  %v115 = vpop.trf.xlu0
  %v116 = vpop.trf.xlu0
  %v117 = vpop.trf.xlu0
  %118 = vxpose.xlu0.b32.start [1/16] %v82, 128
  %119 = vxpose.xlu0.b32.cont [2/16] %v83, 128
  %120 = vxpose.xlu0.b32.cont [3/16] %v84, 128
  %121 = vxpose.xlu0.b32.cont [4/16] %v85, 128
  %122 = vxpose.xlu0.b32.cont [5/16] 0.0, 128
  %123 = vxpose.xlu0.b32.cont [6/16] 0.0, 128
  %124 = vxpose.xlu0.b32.cont [7/16] 0.0, 128
  %125 = vxpose.xlu0.b32.cont [8/16] 0.0, 128
  %126 = vxpose.xlu0.b32.cont [9/16] 0.0, 128
  %127 = vxpose.xlu0.b32.cont [10/16] 0.0, 128
  %128 = vxpose.xlu0.b32.cont [11/16] 0.0, 128
  %129 = vxpose.xlu0.b32.cont [12/16] 0.0, 128
  %130 = vxpose.xlu0.b32.cont [13/16] 0.0, 128
  %131 = vxpose.xlu0.b32.cont [14/16] 0.0, 128
  %132 = vxpose.xlu0.b32.cont [15/16] 0.0, 128
  %133 = vxpose.xlu0.b32.end [16/16] 0.0, 128
  %v134 = vpop.trf.xlu0
  %v135 = vpop.trf.xlu0
  %v136 = vpop.trf.xlu0
  %v137 = vpop.trf.xlu0
  %v138 = vpop.trf.xlu0
  %v139 = vpop.trf.xlu0
  %v140 = vpop.trf.xlu0
  %v141 = vpop.trf.xlu0
  %v142 = vpop.trf.xlu0
  %v143 = vpop.trf.xlu0
  %v144 = vpop.trf.xlu0
  %v145 = vpop.trf.xlu0
  %v146 = vpop.trf.xlu0
  %v147 = vpop.trf.xlu0
  %v148 = vpop.trf.xlu0
  %v149 = vpop.trf.xlu0
  %150 = vst [vmem:[%s4] sm:$0x3f] %v102
  %vm151 = vcmask 259072
  %152 = vst.msk [vmem:[%s4 + $0x8] sm:$0x3f] %vm151, %v134
  %v155 = vcombine.high %v102, %v134
  %v157 = vunpack.c.l.s4 1983009808
  %v158 = vunpack.c.0.s8 %v157
  %v159 = vlaneseq
  %v160 = vshrl.u32 %v159, 7
  %v161 = vsub.s32 %v158, %v160
  %v162 = vrot.slane %v155, %v161
  %v163 = vcombine.high %v162, %v162
  %vm165 = vcmask 1041408
  %vm166 = vcmask 257026
  %vm167 = vmor %vm166, %vm165
  %168 = vst.msk [vmem:[%s5] sm:$0xf] %vm167, %v163
  // Predicated region
  $region10: #{encoder_forward.1} parent=0 // pred_check
    _
  $region11: #{encoder_forward.1} parent=0 // pred_check_branch
    %170 = sbr.rel (0) target = $region13
  $region12: #{encoder_forward.1} parent=0 // pred_region
    _
  $region13: #{encoder_forward.1} parent=0 // pred_fallthru
    _
  // Predicated region
  $region14: #{encoder_forward.1} parent=0 // pred_check
    _
  $region15: #{encoder_forward.1} parent=0 // pred_check_branch
    %172 = sbr.rel (0) target = $region17
  $region16: #{encoder_forward.1} parent=0 // pred_region
    _
  $region17: #{encoder_forward.1} parent=0 // pred_fallthru
    _
  // Predicated region
  $region18: #{encoder_forward.1} parent=0 // pred_check
    _
  $region19: #{encoder_forward.1} parent=0 // pred_check_branch
    %174 = sbr.rel (0) target = $region21
  $region20: #{encoder_forward.1} parent=0 // pred_region
    _
  $region21: #{encoder_forward.1} parent=0 // pred_fallthru
    _
  // Predicated region
  $region22: #{encoder_forward.1} parent=0 // pred_check
    _
  $region23: #{encoder_forward.1} parent=0 // pred_check_branch
    %176 = sbr.rel (0) target = $region25
  $region24: #{encoder_forward.1} parent=0 // pred_region
    _
  $region25: #{encoder_forward.1} parent=0 // pred_fallthru
    _
  // Predicated region
  $region26: #{encoder_forward.1} parent=0 // pred_check
    _
  $region27: #{encoder_forward.1} parent=0 // pred_check_branch
    %178 = sbr.rel (0) target = $region29
  $region28: #{encoder_forward.1} parent=0 // pred_region
    _
  $region29: #{encoder_forward.1} parent=0 // pred_fallthru
    _
  // Predicated region
  $region30: #{encoder_forward.1} parent=0 // pred_check
    _
  $region31: #{encoder_forward.1} parent=0 // pred_check_branch
    %180 = sbr.rel (0) target = $region33
  $region32: #{encoder_forward.1} parent=0 // pred_region
    _
  $region33: #{encoder_forward.1} parent=0 // pred_fallthru
    _
  // Predicated region
  $region34: #{encoder_forward.1} parent=0 // pred_check
    _
  $region35: #{encoder_forward.1} parent=0 // pred_check_branch
    %182 = sbr.rel (0) target = $region37
  $region36: #{encoder_forward.1} parent=0 // pred_region
    _
  $region37: #{encoder_forward.1} parent=0 // pred_fallthru
    _
  // Predicated region
  $region38: #{encoder_forward.1} parent=0 // pred_check
    _
  $region39: #{encoder_forward.1} parent=0 // pred_check_branch
    %184 = sbr.rel (0) target = $region41
  $region40: #{encoder_forward.1} parent=0 // pred_region
    _
  $region41: #{encoder_forward.1} parent=0 // pred_fallthru
    _

</llo_original>
